<compile_context>
chip_gen: v7x
topology: tpu7x:2x2x1
jax: 0.10.0
libtpu: 0.0.40
codegen_flags: <defaults>
</compile_context>

<pallas_src>
import math

import jax
import jax.numpy as jnp
import numpy as np
from jax.experimental import pallas as pl
from jax.experimental.pallas import tpu as pltpu


def _gelu_exact(x):
    # Matches torch.nn.functional.gelu (default, erf-based exact GELU).
    return 0.5 * x * (1.0 + jax.lax.erf(x * (1.0 / math.sqrt(2.0))))


def make_convblock_kernel(kernel_size, dilation, seq_len, pad):
    K, d, L = kernel_size, dilation, seq_len

    def kernel(x_ref, w1_ref, b1_ref, w2_ref, b2_ref, o_ref, hp1, hp2):
        # x_ref block: (1, C_in, L) raw, unpadded input for one batch element.
        x = x_ref[0]                                     # (C_in, L) f32
        c1 = hp1.shape[0]
        c2 = hp2.shape[0]

        # Zero only the two pad strips. The interior [pad:pad+L] is fully
        # overwritten below, so no full-tile zeroing / round-trip is needed.
        # Done every grid step (not program_id==0-gated) so correctness holds
        # when the batch axis is sharded across TensorCores, each with its
        # own scratch. Cost: 4 tiny (C, pad) stores per step.
        if pad > 0:
            z1 = jnp.zeros((c1, pad), hp1.dtype)
            hp1[:, 0:pad] = z1
            hp1[:, pad + L:pad + L + pad] = z1
            z2 = jnp.zeros((c2, pad), hp2.dtype)
            hp2[:, 0:pad] = z2
            hp2[:, pad + L:pad + L + pad] = z2

        # ---- gelu -> conv1 ----
        # gelu(0) == 0, so padding the raw input then applying gelu is the
        # same as writing gelu(x) into an already-zero-padded buffer.
        hp1[:, pad:pad + L] = _gelu_exact(x)
        h1p = hp1[...]                                   # (C_in, Lp) f32
        # Stack the K shifted views along sublanes -> one deep matmul.
        h1 = jnp.concatenate(
            [h1p[:, k * d:k * d + L] for k in range(K)], axis=0
        )                                                # (K*C_in, L)
        y1 = jnp.dot(
            w1_ref[...],                                 # (C_out, K*C_in) bf16
            h1.astype(jnp.bfloat16),
            preferred_element_type=jnp.float32,
        ) + b1_ref[...]                                  # (C_out, L) f32

        # ---- gelu -> conv2 ----
        hp2[:, pad:pad + L] = _gelu_exact(y1)
        h2p = hp2[...]                                   # (C_out, Lp) f32
        h2 = jnp.concatenate(
            [h2p[:, k * d:k * d + L] for k in range(K)], axis=0
        )                                                # (K*C_out, L)
        y2 = jnp.dot(
            w2_ref[...],                                 # (C_out, K*C_out) bf16
            h2.astype(jnp.bfloat16),
            preferred_element_type=jnp.float32,
        ) + b2_ref[...]

        # ---- residual add (raw, un-gelu'd input) ----
        o_ref[0] = (y2 + x).astype(o_ref.dtype)

    return kernel


def conv_block_forward(x, w1, b1, w2, b2, kernel_size, dilation):
    """ConvBlock forward: gelu -> SamePadConv -> gelu -> SamePadConv -> +residual."""
    B, C_in, L = x.shape
    C_out = w1.shape[0]
    K = kernel_size
    assert C_in == C_out, "residual add requires in_channels == out_channels"

    receptive_field = (K - 1) * dilation + 1
    pad = receptive_field // 2
    Lp = L + 2 * pad

    # Weight glue (tiny, parameter-sized, done once per call):
    #   w_flat[o, k*C + i] == w[o, i, k]   (matches the in-kernel tap stacking)
    w1_flat = jnp.transpose(w1, (0, 2, 1)).reshape(C_out, K * C_in).astype(jnp.bfloat16)
    w2_flat = jnp.transpose(w2, (0, 2, 1)).reshape(C_out, K * C_out).astype(jnp.bfloat16)
    b1_c = b1.reshape(C_out, 1).astype(jnp.float32)
    b2_c = b2.reshape(C_out, 1).astype(jnp.float32)

    kernel = make_convblock_kernel(K, dilation, L, pad)

    return pl.pallas_call(
        kernel,
        out_shape=jax.ShapeDtypeStruct((B, C_out, L), x.dtype),
        grid=(B,),
        in_specs=[
            pl.BlockSpec((1, C_in, L), lambda b: (b, 0, 0)),          # raw x
            pl.BlockSpec((C_out, K * C_in), lambda b: (0, 0)),        # w1 flat
            pl.BlockSpec((C_out, 1), lambda b: (0, 0)),               # b1
            pl.BlockSpec((C_out, K * C_out), lambda b: (0, 0)),       # w2 flat
            pl.BlockSpec((C_out, 1), lambda b: (0, 0)),               # b2
        ],
        out_specs=pl.BlockSpec((1, C_out, L), lambda b: (b, 0, 0)),
        scratch_shapes=[
            pltpu.VMEM((C_in, Lp), jnp.float32),    # padded gelu(x)
            pltpu.VMEM((C_out, Lp), jnp.float32),   # padded gelu(conv1 out)
        ],
        compiler_params=pltpu.CompilerParams(
            dimension_semantics=("parallel",),
        ),
    )(x, w1_flat, b1_c, w2_flat, b2_c)


def conv_block_reference(x, w1, b1, w2, b2, kernel_size, dilation):
    """Pure-JAX f32 reference mirroring the PyTorch ConvBlock."""
    receptive_field = (kernel_size - 1) * dilation + 1
    pad = receptive_field // 2
    L = x.shape[2]

    def same_pad_conv(h, w, b):
        out = jax.lax.conv_general_dilated(
            h, w, window_strides=(1,), padding=[(pad, pad)],
            rhs_dilation=(dilation,),
            dimension_numbers=("NCH", "OIH", "NCH"),
        )
        out = out + b[None, :, None]
        return out[:, :, :L]   # == PyTorch's `remove` crop when RF is even

    residual = x
    h = _gelu_exact(x)
    h = same_pad_conv(h, w1, b1)
    h = _gelu_exact(h)
    h = same_pad_conv(h, w2, b2)
    return h + residual


if __name__ == "__main__":
    B, C, L = 2, 8, 16
    kernel_size, dilation = 3, 2   # receptive_field = 5, padding = 2

    key = jax.random.PRNGKey(0)
    kx, kw1, kb1, kw2, kb2 = jax.random.split(key, 5)

    x = jax.random.normal(kx, (B, C, L), dtype=jnp.float32)
    # Deterministic param init (shapes from nn.Conv1d(in, out, K)).
    fan_in = C * kernel_size
    scale = 1.0 / math.sqrt(fan_in)
    w1 = jax.random.uniform(kw1, (C, C, kernel_size), jnp.float32, -scale, scale)
    b1 = jax.random.uniform(kb1, (C,), jnp.float32, -scale, scale)
    w2 = jax.random.uniform(kw2, (C, C, kernel_size), jnp.float32, -scale, scale)
    b2 = jax.random.uniform(kb2, (C,), jnp.float32, -scale, scale)

    out = conv_block_forward(x, w1, b1, w2, b2, kernel_size, dilation)
    out = jax.block_until_ready(out)

    ref = conv_block_reference(x, w1, b1, w2, b2, kernel_size, dilation)
    # Tolerance loosened vs. the pure-f32 version: matmul inputs are bf16
    # (f32 accumulation), per the v6e/v7x MXU recommendation.
    np.testing.assert_allclose(np.asarray(out), np.asarray(ref), rtol=2e-2, atol=2e-2)

    print("KERNEL_OK")
</pallas_src>

<mosaic_0001>
module attributes {stable_mosaic.version = 11 : i64} {
  func.func @kernel(%arg0: i32, %arg1: memref<1x8x16xf32, #tpu.memory_space<vmem>>, %arg2: memref<8x24xbf16, #tpu.memory_space<vmem>>, %arg3: memref<8x1xf32, #tpu.memory_space<vmem>>, %arg4: memref<8x24xbf16, #tpu.memory_space<vmem>>, %arg5: memref<8x1xf32, #tpu.memory_space<vmem>>, %arg6: memref<1x8x16xf32, #tpu.memory_space<vmem>>, %arg7: memref<8x20xf32, #tpu.memory_space<vmem>>, %arg8: memref<8x20xf32, #tpu.memory_space<vmem>>) attributes {dimension_semantics = [#tpu.dimension_semantics<parallel>], iteration_bounds = array<i64: 2>, scalar_prefetch = 0 : i64, scratch_operands = 2 : i64, tpu.core_type = #tpu.core_type<tc>, window_params = [{transform_indices = @transform_0, window_bounds = array<i64: 1, 8, 16>}, {pipeline_mode = #tpu.pipeline_mode<synchronous>, transform_indices = @transform_1, window_bounds = array<i64: 8, 24>}, {pipeline_mode = #tpu.pipeline_mode<synchronous>, transform_indices = @transform_2, window_bounds = array<i64: 8, 1>}, {pipeline_mode = #tpu.pipeline_mode<synchronous>, transform_indices = @transform_3, window_bounds = array<i64: 8, 24>}, {pipeline_mode = #tpu.pipeline_mode<synchronous>, transform_indices = @transform_4, window_bounds = array<i64: 8, 1>}, {transform_indices = @transform_5, window_bounds = array<i64: 1, 8, 16>}]} {
    %c0 = arith.constant 0 : index
    %c0_0 = arith.constant 0 : index
    %c0_1 = arith.constant 0 : index
    %0 = vector.load %arg1[%c0, %c0_0, %c0_1] : memref<1x8x16xf32, #tpu.memory_space<vmem>>, vector<1x8x16xf32>
    %1 = vector.shape_cast %0 : vector<1x8x16xf32> to vector<8x16xf32>
    %cst = arith.constant 0.000000e+00 : f32
    %2 = vector.broadcast %cst : f32 to vector<8x2xf32>
    %c0_2 = arith.constant 0 : index
    %c0_3 = arith.constant 0 : index
    %3 = vector.load %arg7[%c0_2, %c0_3] : memref<8x20xf32, #tpu.memory_space<vmem>>, vector<8x2xf32>
    tpu.vector_store %arg7[%c0_2, %c0_3], %2 {strides = array<i32>} : memref<8x20xf32, #tpu.memory_space<vmem>>, vector<8x2xf32>,
    %c0_4 = arith.constant 0 : index
    %c18 = arith.constant 18 : index
    %4 = vector.load %arg7[%c0_4, %c18] : memref<8x20xf32, #tpu.memory_space<vmem>>, vector<8x2xf32>
    tpu.vector_store %arg7[%c0_4, %c18], %2 {strides = array<i32>} : memref<8x20xf32, #tpu.memory_space<vmem>>, vector<8x2xf32>,
    %cst_5 = arith.constant 0.000000e+00 : f32
    %5 = vector.broadcast %cst_5 : f32 to vector<8x2xf32>
    %c0_6 = arith.constant 0 : index
    %c0_7 = arith.constant 0 : index
    %6 = vector.load %arg8[%c0_6, %c0_7] : memref<8x20xf32, #tpu.memory_space<vmem>>, vector<8x2xf32>
    tpu.vector_store %arg8[%c0_6, %c0_7], %5 {strides = array<i32>} : memref<8x20xf32, #tpu.memory_space<vmem>>, vector<8x2xf32>,
    %c0_8 = arith.constant 0 : index
    %c18_9 = arith.constant 18 : index
    %7 = vector.load %arg8[%c0_8, %c18_9] : memref<8x20xf32, #tpu.memory_space<vmem>>, vector<8x2xf32>
    tpu.vector_store %arg8[%c0_8, %c18_9], %5 {strides = array<i32>} : memref<8x20xf32, #tpu.memory_space<vmem>>, vector<8x2xf32>,
    %cst_10 = arith.constant 5.000000e-01 : f32
    %8 = vector.broadcast %cst_10 : f32 to vector<8x16xf32>
    %9 = arith.mulf %8, %1 : vector<8x16xf32>
    %cst_11 = arith.constant 0.707106769 : f32
    %10 = vector.broadcast %cst_11 : f32 to vector<8x16xf32>
    %11 = arith.mulf %1, %10 : vector<8x16xf32>
    %12 = math.erf %11 : vector<8x16xf32>
    %cst_12 = arith.constant 1.000000e+00 : f32
    %13 = vector.broadcast %cst_12 : f32 to vector<8x16xf32>
    %14 = arith.addf %13, %12 : vector<8x16xf32>
    %15 = arith.mulf %9, %14 : vector<8x16xf32>
    %c0_13 = arith.constant 0 : index
    %c2 = arith.constant 2 : index
    %16 = vector.load %arg7[%c0_13, %c2] : memref<8x20xf32, #tpu.memory_space<vmem>>, vector<8x16xf32>
    tpu.vector_store %arg7[%c0_13, %c2], %15 {strides = array<i32>} : memref<8x20xf32, #tpu.memory_space<vmem>>, vector<8x16xf32>,
    %c0_14 = arith.constant 0 : index
    %c0_15 = arith.constant 0 : index
    %17 = vector.load %arg7[%c0_14, %c0_15] : memref<8x20xf32, #tpu.memory_space<vmem>>, vector<8x20xf32>
    %18 = vector.extract_strided_slice %17 {offsets = [0, 0], sizes = [8, 16], strides = [1, 1]} : vector<8x20xf32> to vector<8x16xf32>
    %19 = vector.extract_strided_slice %17 {offsets = [0, 2], sizes = [8, 16], strides = [1, 1]} : vector<8x20xf32> to vector<8x16xf32>
    %20 = vector.extract_strided_slice %17 {offsets = [0, 4], sizes = [8, 16], strides = [1, 1]} : vector<8x20xf32> to vector<8x16xf32>
    %21 = tpu.concatenate %18, %19, %20 in 0 : vector<8x16xf32>, vector<8x16xf32>, vector<8x16xf32> -> vector<24x16xf32>
    %c0_16 = arith.constant 0 : index
    %c0_17 = arith.constant 0 : index
    %22 = vector.load %arg2[%c0_16, %c0_17] : memref<8x24xbf16, #tpu.memory_space<vmem>>, vector<8x24xbf16>
    %23 = arith.truncf %21 : vector<24x16xf32> to vector<24x16xbf16>
    %cst_18 = arith.constant dense<0.000000e+00> : vector<8x16xf32>
    %24 = tpu.matmul %22, %23, %cst_18 {dimension_numbers = #tpu.dot_dimension_numbers<[1], [0], [0], [1], [0, 0, 1, 1], [], []>} : vector<8x24xbf16>, vector<24x16xbf16>, vector<8x16xf32> -> vector<8x16xf32>
    %c0_19 = arith.constant 0 : index
    %c0_20 = arith.constant 0 : index
    %25 = vector.load %arg3[%c0_19, %c0_20] : memref<8x1xf32, #tpu.memory_space<vmem>>, vector<8x1xf32>
    %26 = vector.broadcast %25 : vector<8x1xf32> to vector<8x16xf32>
    %27 = arith.addf %24, %26 : vector<8x16xf32>
    %cst_21 = arith.constant 5.000000e-01 : f32
    %28 = vector.broadcast %cst_21 : f32 to vector<8x16xf32>
    %29 = arith.mulf %28, %27 : vector<8x16xf32>
    %cst_22 = arith.constant 0.707106769 : f32
    %30 = vector.broadcast %cst_22 : f32 to vector<8x16xf32>
    %31 = arith.mulf %27, %30 : vector<8x16xf32>
    %32 = math.erf %31 : vector<8x16xf32>
    %cst_23 = arith.constant 1.000000e+00 : f32
    %33 = vector.broadcast %cst_23 : f32 to vector<8x16xf32>
    %34 = arith.addf %33, %32 : vector<8x16xf32>
    %35 = arith.mulf %29, %34 : vector<8x16xf32>
    %c0_24 = arith.constant 0 : index
    %c2_25 = arith.constant 2 : index
    %36 = vector.load %arg8[%c0_24, %c2_25] : memref<8x20xf32, #tpu.memory_space<vmem>>, vector<8x16xf32>
    tpu.vector_store %arg8[%c0_24, %c2_25], %35 {strides = array<i32>} : memref<8x20xf32, #tpu.memory_space<vmem>>, vector<8x16xf32>,
    %c0_26 = arith.constant 0 : index
    %c0_27 = arith.constant 0 : index
    %37 = vector.load %arg8[%c0_26, %c0_27] : memref<8x20xf32, #tpu.memory_space<vmem>>, vector<8x20xf32>
    %38 = vector.extract_strided_slice %37 {offsets = [0, 0], sizes = [8, 16], strides = [1, 1]} : vector<8x20xf32> to vector<8x16xf32>
    %39 = vector.extract_strided_slice %37 {offsets = [0, 2], sizes = [8, 16], strides = [1, 1]} : vector<8x20xf32> to vector<8x16xf32>
    %40 = vector.extract_strided_slice %37 {offsets = [0, 4], sizes = [8, 16], strides = [1, 1]} : vector<8x20xf32> to vector<8x16xf32>
    %41 = tpu.concatenate %38, %39, %40 in 0 : vector<8x16xf32>, vector<8x16xf32>, vector<8x16xf32> -> vector<24x16xf32>
    %c0_28 = arith.constant 0 : index
    %c0_29 = arith.constant 0 : index
    %42 = vector.load %arg4[%c0_28, %c0_29] : memref<8x24xbf16, #tpu.memory_space<vmem>>, vector<8x24xbf16>
    %43 = arith.truncf %41 : vector<24x16xf32> to vector<24x16xbf16>
    %cst_30 = arith.constant dense<0.000000e+00> : vector<8x16xf32>
    %44 = tpu.matmul %42, %43, %cst_30 {dimension_numbers = #tpu.dot_dimension_numbers<[1], [0], [0], [1], [0, 0, 1, 1], [], []>} : vector<8x24xbf16>, vector<24x16xbf16>, vector<8x16xf32> -> vector<8x16xf32>
    %c0_31 = arith.constant 0 : index
    %c0_32 = arith.constant 0 : index
    %45 = vector.load %arg5[%c0_31, %c0_32] : memref<8x1xf32, #tpu.memory_space<vmem>>, vector<8x1xf32>
    %46 = vector.broadcast %45 : vector<8x1xf32> to vector<8x16xf32>
    %47 = arith.addf %44, %46 : vector<8x16xf32>
    %48 = arith.addf %47, %1 : vector<8x16xf32>
    %c0_33 = arith.constant 0 : index
    %c0_34 = arith.constant 0 : index
    %c0_35 = arith.constant 0 : index
    %49 = vector.load %arg6[%c0_33, %c0_34, %c0_35] : memref<1x8x16xf32, #tpu.memory_space<vmem>>, vector<1x8x16xf32>
    %50 = vector.shape_cast %49 : vector<1x8x16xf32> to vector<8x16xf32>
    %51 = vector.shape_cast %48 : vector<8x16xf32> to vector<1x8x16xf32>
    tpu.vector_store %arg6[%c0_33, %c0_34, %c0_35], %51 {strides = array<i32>} : memref<1x8x16xf32, #tpu.memory_space<vmem>>, vector<1x8x16xf32>,
    return
  }
  func.func @transform_0(%arg0: i32) -> (i32, i32, i32) {
    %c0_i32 = arith.constant 0 : i32
    %c0_i32_0 = arith.constant 0 : i32
    %c0_i32_1 = arith.constant 0 : i32
    return %arg0, %c0_i32, %c0_i32_0 : i32, i32, i32
  }
  func.func @transform_1(%arg0: i32) -> (i32, i32) {
    %c0_i32 = arith.constant 0 : i32
    %c0_i32_0 = arith.constant 0 : i32
    %c0_i32_1 = arith.constant 0 : i32
    return %c0_i32, %c0_i32_0 : i32, i32
  }
  func.func @transform_2(%arg0: i32) -> (i32, i32) {
    %c0_i32 = arith.constant 0 : i32
    %c0_i32_0 = arith.constant 0 : i32
    %c0_i32_1 = arith.constant 0 : i32
    return %c0_i32, %c0_i32_0 : i32, i32
  }
  func.func @transform_3(%arg0: i32) -> (i32, i32) {
    %c0_i32 = arith.constant 0 : i32
    %c0_i32_0 = arith.constant 0 : i32
    %c0_i32_1 = arith.constant 0 : i32
    return %c0_i32, %c0_i32_0 : i32, i32
  }
  func.func @transform_4(%arg0: i32) -> (i32, i32) {
    %c0_i32 = arith.constant 0 : i32
    %c0_i32_0 = arith.constant 0 : i32
    %c0_i32_1 = arith.constant 0 : i32
    return %c0_i32, %c0_i32_0 : i32, i32
  }
  func.func @transform_5(%arg0: i32) -> (i32, i32, i32) {
    %c0_i32 = arith.constant 0 : i32
    %c0_i32_0 = arith.constant 0 : i32
    %c0_i32_1 = arith.constant 0 : i32
    return %arg0, %c0_i32, %c0_i32_0 : i32, i32, i32
  }
}

</mosaic_0001>

<llo_original>
// kernel: tpu_custom_call.1
$region0: #{tpu_custom_call.1}
  #allocation0 [shape = 'u32[]', space=smem, size = 0x4, offset = 0x4, fixed_abs, tag = 'smem constant byte address 0x4 - core index']
  #allocation1 [shape = 'u32[144,128]{1,0:T(1,128)}', space=vmem, size = 0x12000, scoped, tag = 'internal scratch']
  #allocation2 [shape = 'f32[8,20]{1,0:T(8,128)}', space=vmem, size = 0x1000, scoped, tag = 'scratch operand']
  #allocation3 [shape = 'f32[8,20]{1,0:T(8,128)}', space=vmem, size = 0x1000, scoped, tag = 'scratch operand']
  %s0 = inlined_call_operand.vmem [shape: f32[2,8,16], index: 0, kind: input, shape index: {}]
  %s1 = inlined_call_operand.vmem [shape: bf16[8,24], index: 1, kind: input, shape index: {}]
  %s2 = inlined_call_operand.vmem [shape: f32[8,1], index: 2, kind: input, shape index: {}]
  %s3 = inlined_call_operand.vmem [shape: bf16[8,24], index: 3, kind: input, shape index: {}]
  %s4 = inlined_call_operand.vmem [shape: f32[8,1], index: 4, kind: input, shape index: {}]
  %s5 = inlined_call_operand.hbm [shape: f32[2,8,16], index: 5, kind: output, shape index: {}]
  %s6 = sld [smem:[#allocation0]]
  $region53: #{tpu_custom_call.1} parent=0
    _
  %s8 = ssub.s32 1, %s6
  %s9 = scalar_select 0, %s8, %s6
  $region1: #{tpu_custom_call.1} parent=0
    #allocation4 [shape = 'u8[8192]{0}', space=vmem, size = 0x2000, scoped, tag = 'output window, operand 0']
    #allocation5 [shape = 's32[2]{0}', space=sflag, size = 0x8, scoped, tag = 'scoped memory for tpu_custom_call.1']
    %10 = vsyncpa [#allocation5], 0
    %s11 = scalar_lea.sflag [#allocation5], 1
    %12 = vsyncpa %s11, 0
    loop: start=0, step=1, limit=4
    $region2: #{tpu_custom_call.1} parent=1 // loop_pre_header
      _
    $region3: #{tpu_custom_call.1} parent=1 // loop_header
      %s14 = sphi 0, %s18
      %p15 = scmp.ge.s32.totalorder %s14, 4
      %s24 = sphi 0, %s26
      %s27 = sphi 0, %s24
      %s28 = sphi 0, %s27
      %s44 = sphi 0, %s28
      %s48 = sphi 0, %s48
      %s50 = sphi 0, %s48
      %s51 = sphi 0, %s50
      %s65 = sphi 0, %s51
      %s69 = sphi 0, %s69
      %s71 = sphi 0, %s69
      %s72 = sphi 0, %s71
      %s86 = sphi 0, %s72
      %s90 = sphi 0, %s90
      %s92 = sphi 0, %s90
      %s93 = sphi 0, %s92
      %s107 = sphi 0, %s93
      %s111 = sphi 0, %s111
      %s113 = sphi 0, %s111
      %s114 = sphi 0, %s113
      %s128 = sphi 0, %s114
      %s134 = sphi 0, %s136
      %s137 = sphi 0, %s134
      %s138 = sphi 0, %s137
      %s154 = sphi 0, %s138
    $region4: #{tpu_custom_call.1} parent=1 // loop_header_branch
      %17 = sbr.rel (%p15) target = $region8
    $region5: #{tpu_custom_call.1} parent=1 // loop_body
      %s19 = ssub.s32 %s14, 1
      %s20 = ssub.s32 %s14, 2
      %s21 = sadd.s32 %s14, 1
      %s22 = ssub.s32 %s14, %s21
      %p23 = scmp.eq.s32.totalorder %s22, 0
      %s25 = sadd.s32 %s24, 1
      %s26 = scalar_select %p23, %s24, %s25
      %p29 = pneg %p23
      %p30 = scmp.eq.s32.totalorder %s14, 1
      %p31 = por %p29, %p30
      %p32 = scmp.ne.s32.totalorder %s24, %s27
      %p33 = scmp.eq.s32.totalorder %s14, 0
      %p34 = por %p32, %p33
      %p35 = scmp.ne.s32.totalorder %s24, %s27
      %p36 = scmp.eq.s32.totalorder %s19, 1
      %p37 = por %p35, %p36
      %p38 = scmp.ne.s32.totalorder %s27, %s28
      %p39 = scmp.eq.s32.totalorder %s19, 0
      %p40 = por %p38, %p39
      %p41 = scmp.ne.s32.totalorder %s27, %s28
      %p42 = scmp.eq.s32.totalorder %s20, 1
      %p43 = por %p41, %p42
      %p45 = scmp.ne.s32.totalorder %s28, %s44
      %p46 = scmp.eq.s32.totalorder %s20, 0
      %p47 = por %p45, %p46
      %s49 = sadd.s32 %s48, 1
      %p52 = scmp.eq.s32.totalorder %s14, 1
      %p53 = scmp.ne.s32.totalorder %s48, %s50
      %p54 = scmp.eq.s32.totalorder %s14, 0
      %p55 = por %p53, %p54
      %p56 = scmp.ne.s32.totalorder %s48, %s50
      %p57 = scmp.eq.s32.totalorder %s19, 1
      %p58 = por %p56, %p57
      %p59 = scmp.ne.s32.totalorder %s50, %s51
      %p60 = scmp.eq.s32.totalorder %s19, 0
      %p61 = por %p59, %p60
      %p62 = scmp.ne.s32.totalorder %s50, %s51
      %p63 = scmp.eq.s32.totalorder %s20, 1
      %p64 = por %p62, %p63
      %p66 = scmp.ne.s32.totalorder %s51, %s65
      %p67 = scmp.eq.s32.totalorder %s20, 0
      %p68 = por %p66, %p67
      %s70 = sadd.s32 %s69, 1
      %p73 = scmp.eq.s32.totalorder %s14, 1
      %p74 = scmp.ne.s32.totalorder %s69, %s71
      %p75 = scmp.eq.s32.totalorder %s14, 0
      %p76 = por %p74, %p75
      %p77 = scmp.ne.s32.totalorder %s69, %s71
      %p78 = scmp.eq.s32.totalorder %s19, 1
      %p79 = por %p77, %p78
      %p80 = scmp.ne.s32.totalorder %s71, %s72
      %p81 = scmp.eq.s32.totalorder %s19, 0
      %p82 = por %p80, %p81
      %p83 = scmp.ne.s32.totalorder %s71, %s72
      %p84 = scmp.eq.s32.totalorder %s20, 1
      %p85 = por %p83, %p84
      %p87 = scmp.ne.s32.totalorder %s72, %s86
      %p88 = scmp.eq.s32.totalorder %s20, 0
      %p89 = por %p87, %p88
      %s91 = sadd.s32 %s90, 1
      %p94 = scmp.eq.s32.totalorder %s14, 1
      %p95 = scmp.ne.s32.totalorder %s90, %s92
      %p96 = scmp.eq.s32.totalorder %s14, 0
      %p97 = por %p95, %p96
      %p98 = scmp.ne.s32.totalorder %s90, %s92
      %p99 = scmp.eq.s32.totalorder %s19, 1
      %p100 = por %p98, %p99
      %p101 = scmp.ne.s32.totalorder %s92, %s93
      %p102 = scmp.eq.s32.totalorder %s19, 0
      %p103 = por %p101, %p102
      %p104 = scmp.ne.s32.totalorder %s92, %s93
      %p105 = scmp.eq.s32.totalorder %s20, 1
      %p106 = por %p104, %p105
      %p108 = scmp.ne.s32.totalorder %s93, %s107
      %p109 = scmp.eq.s32.totalorder %s20, 0
      %p110 = por %p108, %p109
      %s112 = sadd.s32 %s111, 1
      %p115 = scmp.eq.s32.totalorder %s14, 1
      %p116 = scmp.ne.s32.totalorder %s111, %s113
      %p117 = scmp.eq.s32.totalorder %s14, 0
      %p118 = por %p116, %p117
      %p119 = scmp.ne.s32.totalorder %s111, %s113
      %p120 = scmp.eq.s32.totalorder %s19, 1
      %p121 = por %p119, %p120
      %p122 = scmp.ne.s32.totalorder %s113, %s114
      %p123 = scmp.eq.s32.totalorder %s19, 0
      %p124 = por %p122, %p123
      %p125 = scmp.ne.s32.totalorder %s113, %s114
      %p126 = scmp.eq.s32.totalorder %s20, 1
      %p127 = por %p125, %p126
      %p129 = scmp.ne.s32.totalorder %s114, %s128
      %p130 = scmp.eq.s32.totalorder %s20, 0
      %p131 = por %p129, %p130
      %s132 = ssub.s32 %s14, %s21
      %p133 = scmp.eq.s32.totalorder %s132, 0
      %s135 = sadd.s32 %s134, 1
      %s136 = scalar_select %p133, %s134, %s135
      %p139 = pneg %p133
      %p140 = scmp.eq.s32.totalorder %s14, 1
      %p141 = por %p139, %p140
      %p142 = scmp.ne.s32.totalorder %s134, %s137
      %p143 = scmp.eq.s32.totalorder %s14, 0
      %p144 = por %p142, %p143
      %p145 = scmp.ne.s32.totalorder %s134, %s137
      %p146 = scmp.eq.s32.totalorder %s19, 1
      %p147 = por %p145, %p146
      %p148 = scmp.ne.s32.totalorder %s137, %s138
      %p149 = scmp.eq.s32.totalorder %s19, 0
      %p150 = por %p148, %p149
      %p151 = scmp.ne.s32.totalorder %s137, %s138
      %p152 = scmp.eq.s32.totalorder %s20, 1
      %p153 = por %p151, %p152
      %p155 = scmp.ne.s32.totalorder %s138, %s154
      %p156 = scmp.eq.s32.totalorder %s20, 0
      %p157 = por %p155, %p156
      %p158 = scmp.le.s32.totalorder 1, %s14
      %p159 = scmp.lt.s32.totalorder %s14, 3
      %p160 = pnand %p158, %p159
      %p161 = pneg %p160
      // Predicated region
      $region9: #{tpu_custom_call.1} parent=5 // pred_check
        _
      $region10: #{tpu_custom_call.1} parent=5 // pred_check_branch
        %163 = sbr.rel (%p160) target = $region12
      $region11: #{tpu_custom_call.1} parent=5 // pred_region
        %s164 = ssub.s32 %s14, 1
        // Predicated region
        $region13: #{tpu_custom_call.1} parent=11 // pred_check
          %p165 = pneg %p61
        $region14: #{tpu_custom_call.1} parent=11 // pred_check_branch
          %167 = sbr.rel (%p165) target = $region16
        $region15: #{tpu_custom_call.1} parent=11 // pred_region
          _
        $region16: #{tpu_custom_call.1} parent=11 // pred_fallthru
          _
        // Predicated region
        $region17: #{tpu_custom_call.1} parent=11 // pred_check
          %p168 = pneg %p82
        $region18: #{tpu_custom_call.1} parent=11 // pred_check_branch
          %170 = sbr.rel (%p168) target = $region20
        $region19: #{tpu_custom_call.1} parent=11 // pred_region
          _
        $region20: #{tpu_custom_call.1} parent=11 // pred_fallthru
          _
        // Predicated region
        $region21: #{tpu_custom_call.1} parent=11 // pred_check
          %p171 = pneg %p103
        $region22: #{tpu_custom_call.1} parent=11 // pred_check_branch
          %173 = sbr.rel (%p171) target = $region24
        $region23: #{tpu_custom_call.1} parent=11 // pred_region
          _
        $region24: #{tpu_custom_call.1} parent=11 // pred_fallthru
          _
        // Predicated region
        $region25: #{tpu_custom_call.1} parent=11 // pred_check
          %p174 = pneg %p124
        $region26: #{tpu_custom_call.1} parent=11 // pred_check_branch
          %176 = sbr.rel (%p174) target = $region28
        $region27: #{tpu_custom_call.1} parent=11 // pred_region
          _
        $region28: #{tpu_custom_call.1} parent=11 // pred_fallthru
          _
      $region12: #{tpu_custom_call.1} parent=5 // pred_fallthru
        _
      %p177 = scmp.lt.s32.totalorder %s14, 2
      // Predicated region
      $region29: #{tpu_custom_call.1} parent=5 // pred_check
        %p178 = pneg %p177
      $region30: #{tpu_custom_call.1} parent=5 // pred_check_branch
        %180 = sbr.rel (%p178) target = $region32
      $region31: #{tpu_custom_call.1} parent=5 // pred_region
        // Predicated region
        $region33: #{tpu_custom_call.1} parent=31 // pred_check
          %p181 = pneg %p34
        $region34: #{tpu_custom_call.1} parent=31 // pred_check_branch
          %183 = sbr.rel (%p181) target = $region36
        $region35: #{tpu_custom_call.1} parent=31 // pred_region
          %p184 = scmp.lt.s32.totalorder %s14, 1
          %s185 = scalar_select %p184, %s14, 1
          %s186 = smul.addr %s185, 8
          %s187 = scalar_lea.vmem %s0, %s186
        $region36: #{tpu_custom_call.1} parent=31 // pred_fallthru
          _
      $region32: #{tpu_custom_call.1} parent=5 // pred_fallthru
        _
      %p188 = scmp.le.s32.totalorder 1, %s14
      %p189 = scmp.lt.s32.totalorder %s14, 3
      %p190 = pnand %p188, %p189
      %p191 = pneg %p190
      // Predicated region
      $region37: #{tpu_custom_call.1} parent=5 // pred_check
        _
      $region38: #{tpu_custom_call.1} parent=5 // pred_check_branch
        %193 = sbr.rel (%p190) target = $region40
      $region39: #{tpu_custom_call.1} parent=5 // pred_region
        %s194 = ssub.s32 %s14, 1
        %p195 = scmp.lt.s32.totalorder %s19, 1
        %s196 = scalar_select %p195, %s19, 1
        %s197 = smul.addr %s196, 8
        %s198 = scalar_lea.vmem %s0, %s197
        %p199 = pneg %p40
        %p200 = pneg %p37
        %p201 = pneg %p61
        %p202 = pneg %p58
        %p203 = pneg %p82
        %p204 = pneg %p79
        %p205 = pneg %p103
        %p206 = pneg %p100
        %p207 = pneg %p124
        %p208 = pneg %p121
        %p209 = pneg %p150
        %p210 = pneg %p147
        %s211 = sand.u32 %s137, 1
        %s212 = scalar_lea.sflag [#allocation5], %s211
        %s213 = sand.u32 %s137, 1
        %s214 = smul.addr %s213, 8
        %s215 = scalar_lea.vmem [#allocation4], %s214
        %p216 = scmp.lt.s32.totalorder %s19, 1
        %s217 = scalar_select %p216, %s19, 1
        %s218 = smul.addr %s217, 8
        %s219 = scalar_lea.vmem %s0, %s218
        %v221 = vld [vmem:[%s219] sm:$0xff]
        %vm222 = vcmask 15360
        %223 = vst.msk [vmem:[#allocation2] sm:$0xff] %vm222, 0.0
        %vm224 = vcmask 162960
        %225 = vst.msk [vmem:[#allocation2] sm:$0xff] %vm224, 0.0
        %226 = vst.msk [vmem:[#allocation3] sm:$0xff] %vm222, 0.0
        %227 = vst.msk [vmem:[#allocation3] sm:$0xff] %vm224, 0.0
        %v228 = vmul.f32 %v221, 0.5
        %v229 = vmul.f32 %v221, 0.70710677
        %v230 = verf.f32.pop %v229
        %v231 = vadd.f32 %v230, 1.0
        %v232 = vmul.f32 %v228, %v231
        %234 = vrot.lane.b32.xlu0 %v232, 2
        %v235 = vpop.permute.xlu0 %234
        %vm237 = vcmask 146448
        %238 = vst.msk [vmem:[#allocation2] sm:$0xff] %vm237, %v235
        %v239 = vld [vmem:[#allocation2] sm:$0xff]
        %241 = vrot.lane.b32.xlu0 %v239, 126
        %v242 = vpop.permute.xlu0 %241
        %244 = vrot.lane.b32.xlu0 %v239, 124
        %v245 = vpop.permute.xlu0 %244
        %v247 = vld [vmem:[%s1] sm:$0xf]
        %v248 = vpack.c.bf16 %v242, %v239
        %v249 = vpack.c.bf16 %v245, %v245
        %v250 = vld [vmem:[%s2] sm:$0xff]
        %252 = vset.pattern.permute.xlu0 0
        %253 = vperm.xlu0 %252, %v250
        %v254 = vpop.permute.xlu0 %253
        %vm256 = vcmask 195584
        %v258 = vsel %vm256, %v247, 0
        %vm260 = vcmask 1043456
        %v262 = vsel %vm260, %v249, 0
        %264 = vmatprep.subr.bf16.mxu0 0
        %265 = vmatpush1.bf16.msra.mxu0 %v248
        %266 = vmatprep.subr.bf16.mxu0 0
        %267 = vmatpush1.bf16.msra.mxu0 %v262
        %268 = vmatprep.subr.bf16.mxu0 0
        %269 = vmatpush1.bf16.msra.mxu0 0
        %270 = vmatprep.subr.bf16.mxu0 0
        %271 = vmatpush1.bf16.msra.mxu0 0
        %272 = vmatprep.subr.bf16.mxu0 0
        %273 = vmatpush1.bf16.msra.mxu0 0
        %274 = vmatprep.subr.bf16.mxu0 0
        %275 = vmatpush1.bf16.msra.mxu0 0
        %276 = vmatprep.subr.bf16.mxu0 0
        %277 = vmatpush1.bf16.msra.mxu0 0
        %278 = vmatprep.subr.bf16.mxu0 0
        %279 = vmatpush1.bf16.msra.mxu0 0
        %280 = vmatprep.subr.bf16.mxu0 0
        %281 = vmatpush1.bf16.msra.mxu0 0
        %282 = vmatprep.subr.bf16.mxu0 0
        %283 = vmatpush1.bf16.msra.mxu0 0
        %284 = vmatprep.subr.bf16.mxu0 0
        %285 = vmatpush1.bf16.msra.mxu0 0
        %286 = vmatprep.subr.bf16.mxu0 0
        %287 = vmatpush1.bf16.msra.mxu0 0
        %288 = vmatprep.subr.bf16.mxu0 0
        %289 = vmatpush1.bf16.msra.mxu0 0
        %290 = vmatprep.subr.bf16.mxu0 0
        %291 = vmatpush1.bf16.msra.mxu0 0
        %292 = vmatprep.subr.bf16.mxu0 0
        %293 = vmatpush1.bf16.msra.mxu0 0
        %294 = vmatprep.subr.bf16.mxu0 0
        %295 = vmatpush1.bf16.msra.mxu0 0
        %296 = vmatprep.mubr.bf16.mxu0 0
        %297 = vmatmul.mubr.bf16.gmra.mrb[0].mxu0 %v258
        %v298 = vpop.f32.mrb[0].mxu0
        %v299 = vadd.f32 %v254, %v298
        %v300 = vpop.f32.mrb[0].mxu0
        %v301 = vpop.f32.mrb[0].mxu0
        %v302 = vpop.f32.mrb[0].mxu0
        %303 = vdwg.mxu0
        %v304 = vmul.f32 %v299, 0.5
        %v305 = vmul.f32 %v299, 0.70710677
        %v306 = verf.f32.pop %v305
        %v307 = vadd.f32 %v306, 1.0
        %v308 = vmul.f32 %v304, %v307
        %310 = vrot.lane.b32.xlu0 %v308, 2
        %v311 = vpop.permute.xlu0 %310
        %313 = vst.msk [vmem:[#allocation3] sm:$0xff] %vm237, %v311
        %v314 = vld [vmem:[#allocation3] sm:$0xff]
        %316 = vrot.lane.b32.xlu0 %v314, 126
        %v317 = vpop.permute.xlu0 %316
        %319 = vrot.lane.b32.xlu0 %v314, 124
        %v320 = vpop.permute.xlu0 %319
        %v322 = vld [vmem:[%s3] sm:$0xf]
        %v323 = vpack.c.bf16 %v317, %v314
        %v324 = vpack.c.bf16 %v320, %v320
        %v325 = vld [vmem:[%s4] sm:$0xff]
        %327 = vset.pattern.permute.xlu0 0
        %328 = vperm.xlu0 %327, %v325
        %v329 = vpop.permute.xlu0 %328
        %v332 = vsel %vm256, %v322, 0
        %v335 = vsel %vm260, %v324, 0
        %337 = vmatprep.subr.bf16.mxu0 0
        %338 = vmatpush1.bf16.msra.mxu0 %v323
        %339 = vmatprep.subr.bf16.mxu0 0
        %340 = vmatpush1.bf16.msra.mxu0 %v335
        %341 = vmatprep.subr.bf16.mxu0 0
        %342 = vmatpush1.bf16.msra.mxu0 0
        %343 = vmatprep.subr.bf16.mxu0 0
        %344 = vmatpush1.bf16.msra.mxu0 0
        %345 = vmatprep.subr.bf16.mxu0 0
        %346 = vmatpush1.bf16.msra.mxu0 0
        %347 = vmatprep.subr.bf16.mxu0 0
        %348 = vmatpush1.bf16.msra.mxu0 0
        %349 = vmatprep.subr.bf16.mxu0 0
        %350 = vmatpush1.bf16.msra.mxu0 0
        %351 = vmatprep.subr.bf16.mxu0 0
        %352 = vmatpush1.bf16.msra.mxu0 0
        %353 = vmatprep.subr.bf16.mxu0 0
        %354 = vmatpush1.bf16.msra.mxu0 0
        %355 = vmatprep.subr.bf16.mxu0 0
        %356 = vmatpush1.bf16.msra.mxu0 0
        %357 = vmatprep.subr.bf16.mxu0 0
        %358 = vmatpush1.bf16.msra.mxu0 0
        %359 = vmatprep.subr.bf16.mxu0 0
        %360 = vmatpush1.bf16.msra.mxu0 0
        %361 = vmatprep.subr.bf16.mxu0 0
        %362 = vmatpush1.bf16.msra.mxu0 0
        %363 = vmatprep.subr.bf16.mxu0 0
        %364 = vmatpush1.bf16.msra.mxu0 0
        %365 = vmatprep.subr.bf16.mxu0 0
        %366 = vmatpush1.bf16.msra.mxu0 0
        %367 = vmatprep.subr.bf16.mxu0 0
        %368 = vmatpush1.bf16.msra.mxu0 0
        %369 = vmatprep.mubr.bf16.mxu0 0
        %370 = vmatmul.mubr.bf16.gmra.mrb[0].mxu0 %v332
        %v371 = vpop.f32.mrb[0].mxu0
        %v372 = vadd.f32 %v329, %v371
        %v373 = vpop.f32.mrb[0].mxu0
        %v374 = vpop.f32.mrb[0].mxu0
        %v375 = vpop.f32.mrb[0].mxu0
        %376 = vdwg.mxu0
        %v377 = vadd.f32 %v372, %v221
        %vm378 = vcmask 130048
        %379 = vst.msk [vmem:[%s215] sm:$0xff] %vm378, %v377
        %s380 = sand.u32 %s137, 1
        %s381 = scalar_lea.sflag [#allocation5], %s380
        %s382 = sand.u32 %s137, 1
        %s383 = smul.addr %s382, 8
        %s384 = scalar_lea.vmem [#allocation4], %s383
        // Predicated region
        $region41: #{tpu_custom_call.1} parent=39 // pred_check
          %p385 = pneg %p147
        $region42: #{tpu_custom_call.1} parent=39 // pred_check_branch
          %387 = sbr.rel (%p385) target = $region44
        $region43: #{tpu_custom_call.1} parent=39 // pred_region
          %s389 = ssub.s32 128, 128
          %390 = vsyncadd %s381, %s389
          %s391 = smul.addr %s19, 128
          %s392 = scalar_lea.hbm %s5, %s391
          %s394 = sshll.u32 %s384, 4
          %s395 = int_to_ptr.vmem [resolvable:$true] %s394
          %397 = dma.vmem_to_hbm [thread:$0]  %s395, 128, %s392, %s381
        $region44: #{tpu_custom_call.1} parent=39 // pred_fallthru
          _
      $region40: #{tpu_custom_call.1} parent=5 // pred_fallthru
        _
      %p398 = scmp.le.s32.totalorder 2, %s14
      // Predicated region
      $region45: #{tpu_custom_call.1} parent=5 // pred_check
        %p399 = pneg %p398
      $region46: #{tpu_custom_call.1} parent=5 // pred_check_branch
        %401 = sbr.rel (%p399) target = $region48
      $region47: #{tpu_custom_call.1} parent=5 // pred_region
        %s402 = ssub.s32 %s14, 2
        // Predicated region
        $region49: #{tpu_custom_call.1} parent=47 // pred_check
          %p403 = pneg %p153
        $region50: #{tpu_custom_call.1} parent=47 // pred_check_branch
          %405 = sbr.rel (%p403) target = $region52
        $region51: #{tpu_custom_call.1} parent=47 // pred_region
          %s406 = sand.u32 %s138, 1
          %s407 = scalar_lea.sflag [#allocation5], %s406
          %s408 = sand.u32 %s138, 1
          %s409 = smul.addr %s408, 8
          %s410 = scalar_lea.vmem [#allocation4], %s409
          %411 = dma.done %s407, 128
        $region52: #{tpu_custom_call.1} parent=47 // pred_fallthru
          _
      $region48: #{tpu_custom_call.1} parent=5 // pred_fallthru
        _
    $region6: #{tpu_custom_call.1} parent=1 // loop_footer
      %s18 = sadd.s32 1, %s14
    $region7: #{tpu_custom_call.1} parent=1 // loop_footer_branch
      %13 = sbr.rel target = $region3
    $region8: #{tpu_custom_call.1} parent=1 // loop_exit
      _
    %412 = vsyncpa [#allocation5], 1
    %s413 = scalar_lea.sflag [#allocation5], 1
    %414 = vsyncpa %s413, 1

</llo_original>
